<compile_context>
chip_gen: v6e
topology: v6e:2x2x1
jax: 0.10.0
libtpu: 0.0.40
codegen_flags: <defaults>
</compile_context>

<pallas_src>
import functools

import jax
import jax.numpy as jnp
from jax import lax
from jax.experimental import pallas as pl
from jax.experimental.pallas import tpu as pltpu


def _cb_focal_kernel(xT_ref, tgt_ref, alpha_ref, out_ref,
                     *, gamma: float, ignore_index: int, n_tokens: int):
    """One token tile in transposed layout (classes on sublanes, tokens on lanes).

    xT_ref:    [C, TN]    logits (f32 or bf16; promoted to f32 in-kernel)
    tgt_ref:   [1, TN]    int32 targets (lane-dense)
    alpha_ref: [C, 1]     f32 class-balanced weights
    out_ref:   [1, 2, TN] f32; row 0 = per-token focal loss, row 1 = valid flag
    """
    x = xT_ref[...].astype(jnp.float32)                       # [C, TN]
    t = tgt_ref[...]                                          # [1, TN]
    alpha = alpha_ref[...]                                     # [C, 1]
    c, tn = x.shape

    # Ragged-tail mask (no wrapper pad): global token index vs true N.
    tok = pl.program_id(0) * tn + lax.broadcasted_iota(jnp.int32, (1, tn), 1)
    valid = (t != ignore_index) & (tok < n_tokens)             # [1, TN]

    # Numerically stable log-softmax pieces; class reductions are cheap
    # sublane reductions in this layout.
    m = jnp.max(x, axis=0, keepdims=True)                      # [1, TN]
    ex = jnp.exp(x - m)                                         # [C, TN]  (EUP)
    sumex = jnp.sum(ex, axis=0, keepdims=True)                  # [1, TN]

    cls = lax.broadcasted_iota(jnp.int32, (c, tn), 0)
    onehot = ((cls == t) & valid).astype(jnp.float32)           # [C, TN]; 0 if ignored/OOB

    ex_t = jnp.sum(onehot * ex, axis=0, keepdims=True)          # exp(x_t - m)   [1, TN]
    alpha_t = jnp.sum(onehot * alpha, axis=0, keepdims=True)    # alpha[target]; 0 if invalid

    # Guard invalid / out-of-bounds lanes (their x may be garbage -> NaN/Inf in
    # ex/sumex) and exp underflow of ex_t, so ce stays finite everywhere.
    sumex_s = jnp.where(valid, sumex, 1.0)
    ex_t_s = jnp.where(valid, jnp.maximum(ex_t, 1e-37), 1.0)

    # ce = -log(pt) = log(sum exp) - log(exp(x_t - m)); pt = exp(-ce) exactly.
    ce = jnp.maximum(jnp.log(sumex_s) - jnp.log(ex_t_s), 0.0)   # [1, TN]
    pt = jnp.exp(-ce)
    one_m_pt = jnp.maximum(1.0 - pt, 0.0)

    g_int = int(gamma)
    if float(gamma) == float(g_int) and 0 <= g_int <= 8:
        mod = ce
        for _ in range(g_int):                                  # integer power -> VPU multiplies
            mod = mod * one_m_pt
    else:
        mod = jnp.power(one_m_pt, gamma) * ce                   # general (non-integer) gamma

    focal = alpha_t * mod                                       # [1, TN]; exactly 0 on invalid lanes
    validf = valid.astype(jnp.float32)                          # [1, TN]

    out_ref[...] = jnp.concatenate([focal, validf], axis=0).reshape(1, 2, tn)


def class_balanced_focal_loss(logits, targets, class_weights,
                              gamma: float = 2.0, ignore_index: int = -100):
    """Mean class-balanced focal loss over non-ignored tokens (PyTorch semantics)."""
    *lead, C = logits.shape
    N = 1
    for d in lead:
        N *= d

    # One transpose in the wrapper puts tokens on the 128-lane axis inside the
    # kernel (classes -> sublanes).  No row padding: the ragged tail is masked
    # in-kernel.  bf16 logits stay bf16 on the HBM->VMEM path.
    xT = logits.reshape(N, C).T                                 # [C, N]
    t = targets.reshape(1, N).astype(jnp.int32)                 # lane-dense targets
    alpha = jnp.asarray(class_weights, jnp.float32).reshape(C, 1)

    # Token tile: multiple of 128 (lane width).  Per-tile VMEM with f32 promotion:
    # logits (16 x TN) f32 + targets (8 x TN) i32 + packed output + temporaries,
    # double-buffered, is ~0.3 MiB at TN=1024 -> far below v5e's 16 MiB scoped
    # default, while keeping per-step work large vs the ~0.35 us grid overhead.
    if N <= 128:
        TN = N                                                  # single sub-vreg block
    else:
        TN = 1024
        while TN > 128 and pl.cdiv(N, TN) < 2:                  # give v7x's 2 TCs >= 2 steps
            TN //= 2
    G = pl.cdiv(N, TN)

    kernel = functools.partial(_cb_focal_kernel, gamma=gamma,
                               ignore_index=ignore_index, n_tokens=N)

    parts = pl.pallas_call(
        kernel,
        out_shape=jax.ShapeDtypeStruct((G, 2, TN), jnp.float32),
        grid_spec=pltpu.PrefetchScalarGridSpec(
            num_scalar_prefetch=0,
            grid=(G,),
            in_specs=[
                pl.BlockSpec((C, TN), lambda i: (0, i)),         # logits: lane-dense tokens
                pl.BlockSpec((1, TN), lambda i: (0, i)),         # targets: lane-dense
                pl.BlockSpec((C, 1), lambda i: (0, 0)),          # weights: constant block
            ],
            out_specs=pl.BlockSpec((1, 2, TN), lambda i: (i, 0, 0)),
        ),
        compiler_params=pltpu.CompilerParams(
            dimension_semantics=("parallel",)),                  # megacore-shardable on v7x
    )(xT, t, alpha)

    total = jnp.sum(parts[:, 0, :])
    count = jnp.sum(parts[:, 1, :])
    # PyTorch returns 0.0 when there are no valid tokens; otherwise mean over valid.
    return jnp.where(count > 0, total / jnp.maximum(count, 1.0), jnp.float32(0.0))


def make_class_balanced_weights(class_frequencies, num_labels, beta=0.9999):
    """Effective-number class weights (ClassBalancedLoss.__init__)."""
    freqs = jnp.asarray(class_frequencies, dtype=jnp.float32)
    effective_num = 1.0 - jnp.power(beta, freqs)
    weights = (1.0 - beta) / effective_num
    return weights / jnp.sum(weights) * num_labels


def _reference_loss(logits, targets, class_weights, gamma=2.0, ignore_index=-100):
    """Pure-JAX reference mirroring the PyTorch forward."""
    C = logits.shape[-1]
    x = logits.reshape(-1, C).astype(jnp.float32)
    t = targets.reshape(-1)
    valid = t != ignore_index
    logp = jax.nn.log_softmax(x, axis=-1)
    t_safe = jnp.where(valid, t, 0)
    ce = -jnp.take_along_axis(logp, t_safe[:, None], axis=-1)[:, 0]
    pt = jnp.exp(-ce)
    alpha_t = jnp.asarray(class_weights, jnp.float32)[t_safe]
    focal = alpha_t * (1.0 - pt) ** gamma * ce
    focal = jnp.where(valid, focal, 0.0)
    cnt = jnp.sum(valid.astype(jnp.float32))
    return jnp.where(cnt > 0, jnp.sum(focal) / jnp.maximum(cnt, 1.0), 0.0)


if __name__ == "__main__":
    key = jax.random.PRNGKey(0)
    ignore_index = -100
    beta = 0.9999
    gamma = 2.0  # FocalLoss default
    num_labels = 9
    class_frequencies = [100000, 5000, 5000, 3000, 3000, 2000, 2000, 1000, 1000]
    class_weights = make_class_balanced_weights(class_frequencies, num_labels, beta)

    # Small NER-like shape: [batch, seq, num_labels].
    batch, seq = 2, 8
    k1, k2, k3 = jax.random.split(key, 3)
    logits = jax.random.normal(k1, (batch, seq, num_labels), dtype=jnp.float32)
    targets = jax.random.randint(k2, (batch, seq), 0, num_labels, dtype=jnp.int32)
    ignore_mask = jax.random.bernoulli(k3, 0.25, (batch, seq))
    targets = jnp.where(ignore_mask, ignore_index, targets)

    loss = jax.block_until_ready(class_balanced_focal_loss(
        logits, targets, class_weights, gamma=gamma, ignore_index=ignore_index))
    ref = jax.block_until_ready(
        _reference_loss(logits, targets, class_weights, gamma, ignore_index))
    assert jnp.allclose(loss, ref, rtol=5e-4, atol=1e-6), (loss, ref)

    # All-ignored edge case: PyTorch returns 0.0 (same shapes -> same compile).
    all_ignored = jnp.full((batch, seq), ignore_index, dtype=jnp.int32)
    z = jax.block_until_ready(class_balanced_focal_loss(
        logits, all_ignored, class_weights, gamma=gamma, ignore_index=ignore_index))
    assert jnp.allclose(z, 0.0), z

    # Larger check exercising the 128-lane tiling, multi-step grid and the
    # in-kernel ragged-tail mask (N = 3*100 = 300 -> TN=256, G=2, 44-token tail).
    kb1, kb2, kb3 = jax.random.split(jax.random.PRNGKey(0), 3)
    logits_b = jax.random.normal(kb1, (3, 100, num_labels), dtype=jnp.float32)
    targets_b = jax.random.randint(kb2, (3, 100), 0, num_labels, dtype=jnp.int32)
    targets_b = jnp.where(jax.random.bernoulli(kb3, 0.2, (3, 100)),
                          ignore_index, targets_b)
    loss_b = jax.block_until_ready(class_balanced_focal_loss(
        logits_b, targets_b, class_weights, gamma=gamma, ignore_index=ignore_index))
    ref_b = jax.block_until_ready(
        _reference_loss(logits_b, targets_b, class_weights, gamma, ignore_index))
    assert jnp.allclose(loss_b, ref_b, rtol=5e-4, atol=1e-6), (loss_b, ref_b)

    print("KERNEL_OK")
</pallas_src>

<mosaic_0001>
module attributes {stable_mosaic.version = 11 : i64} {
  func.func @_cb_focal_kernel(%arg0: i32, %arg1: memref<9x16xf32, #tpu.memory_space<vmem>>, %arg2: memref<1x16xi32, #tpu.memory_space<vmem>>, %arg3: memref<9x1xf32, #tpu.memory_space<vmem>>, %arg4: memref<1x2x16xf32, #tpu.memory_space<vmem>>) attributes {dimension_semantics = [#tpu.dimension_semantics<parallel>], iteration_bounds = array<i64: 1>, scalar_prefetch = 0 : i64, scratch_operands = 0 : i64, tpu.core_type = #tpu.core_type<tc>, window_params = [{transform_indices = @transform_0, window_bounds = array<i64: 9, 16>}, {transform_indices = @transform_1, window_bounds = array<i64: 1, 16>}, {pipeline_mode = #tpu.pipeline_mode<synchronous>, transform_indices = @transform_2, window_bounds = array<i64: 9, 1>}, {transform_indices = @transform_3, window_bounds = array<i64: 1, 2, 16>}]} {
    %c0 = arith.constant 0 : index
    %c0_0 = arith.constant 0 : index
    %0 = vector.load %arg1[%c0, %c0_0] : memref<9x16xf32, #tpu.memory_space<vmem>>, vector<9x16xf32>
    %c0_1 = arith.constant 0 : index
    %c0_2 = arith.constant 0 : index
    %1 = vector.load %arg2[%c0_1, %c0_2] : memref<1x16xi32, #tpu.memory_space<vmem>>, vector<1x16xi32>
    %c0_3 = arith.constant 0 : index
    %c0_4 = arith.constant 0 : index
    %2 = vector.load %arg3[%c0_3, %c0_4] : memref<9x1xf32, #tpu.memory_space<vmem>>, vector<9x1xf32>
    %c16_i32 = arith.constant 16 : i32
    %3 = arith.muli %arg0, %c16_i32 : i32
    %4 = tpu.iota {dimensions = array<i32: 1>} : vector<1x16xi32>
    %5 = vector.broadcast %3 : i32 to vector<1x16xi32>
    %6 = arith.addi %5, %4 : vector<1x16xi32>
    %c-100_i32 = arith.constant -100 : i32
    %7 = vector.broadcast %c-100_i32 : i32 to vector<1x16xi32>
    %8 = arith.cmpi ne, %1, %7 : vector<1x16xi32>
    %c16_i32_5 = arith.constant 16 : i32
    %9 = vector.broadcast %c16_i32_5 : i32 to vector<1x16xi32>
    %10 = arith.cmpi slt, %6, %9 : vector<1x16xi32>
    %11 = arith.andi %8, %10 : vector<1x16xi1>
    %cst = arith.constant dense<0xFF800000> : vector<16xf32>
    %12 = vector.multi_reduction <maximumf>, %0, %cst [0] : vector<9x16xf32> to vector<16xf32>
    %13 = vector.shape_cast %12 : vector<16xf32> to vector<1x16xf32>
    %14 = vector.broadcast %13 : vector<1x16xf32> to vector<9x16xf32>
    %15 = arith.subf %0, %14 : vector<9x16xf32>
    %16 = math.exp %15 : vector<9x16xf32>
    %cst_6 = arith.constant dense<0.000000e+00> : vector<16xf32>
    %17 = vector.multi_reduction <add>, %16, %cst_6 [0] : vector<9x16xf32> to vector<16xf32>
    %18 = vector.shape_cast %17 : vector<16xf32> to vector<1x16xf32>
    %19 = tpu.iota {dimensions = array<i32: 0>} : vector<9x16xi32>
    %20 = vector.broadcast %1 : vector<1x16xi32> to vector<9x16xi32>
    %21 = arith.cmpi eq, %19, %20 : vector<9x16xi32>
    %22 = vector.broadcast %11 : vector<1x16xi1> to vector<9x16xi1>
    %23 = arith.andi %21, %22 : vector<9x16xi1>
    %24 = arith.extui %23 : vector<9x16xi1> to vector<9x16xi32>
    %25 = arith.sitofp %24 : vector<9x16xi32> to vector<9x16xf32>
    %26 = arith.mulf %25, %16 : vector<9x16xf32>
    %cst_7 = arith.constant dense<0.000000e+00> : vector<16xf32>
    %27 = vector.multi_reduction <add>, %26, %cst_7 [0] : vector<9x16xf32> to vector<16xf32>
    %28 = vector.shape_cast %27 : vector<16xf32> to vector<1x16xf32>
    %29 = vector.broadcast %2 : vector<9x1xf32> to vector<9x16xf32>
    %30 = arith.mulf %25, %29 : vector<9x16xf32>
    %cst_8 = arith.constant dense<0.000000e+00> : vector<16xf32>
    %31 = vector.multi_reduction <add>, %30, %cst_8 [0] : vector<9x16xf32> to vector<16xf32>
    %32 = vector.shape_cast %31 : vector<16xf32> to vector<1x16xf32>
    %cst_9 = arith.constant 1.000000e+00 : f32
    %33 = vector.broadcast %cst_9 : f32 to vector<1x16xf32>
    %34 = arith.select %11, %18, %33 : vector<1x16xi1>, vector<1x16xf32>
    %cst_10 = arith.constant 9.99999991E-38 : f32
    %35 = vector.broadcast %cst_10 : f32 to vector<1x16xf32>
    %36 = arith.maximumf %28, %35 : vector<1x16xf32>
    %cst_11 = arith.constant 1.000000e+00 : f32
    %37 = vector.broadcast %cst_11 : f32 to vector<1x16xf32>
    %38 = arith.select %11, %36, %37 : vector<1x16xi1>, vector<1x16xf32>
    %39 = math.log %34 : vector<1x16xf32>
    %40 = math.log %38 : vector<1x16xf32>
    %41 = arith.subf %39, %40 : vector<1x16xf32>
    %cst_12 = arith.constant 0.000000e+00 : f32
    %42 = vector.broadcast %cst_12 : f32 to vector<1x16xf32>
    %43 = arith.maximumf %41, %42 : vector<1x16xf32>
    %cst_13 = arith.constant 0.000000e+00 : f32
    %44 = vector.broadcast %cst_13 : f32 to vector<1x16xf32>
    %45 = arith.subf %44, %43 : vector<1x16xf32>
    %46 = math.exp %45 : vector<1x16xf32>
    %cst_14 = arith.constant 1.000000e+00 : f32
    %47 = vector.broadcast %cst_14 : f32 to vector<1x16xf32>
    %48 = arith.subf %47, %46 : vector<1x16xf32>
    %cst_15 = arith.constant 0.000000e+00 : f32
    %49 = vector.broadcast %cst_15 : f32 to vector<1x16xf32>
    %50 = arith.maximumf %48, %49 : vector<1x16xf32>
    %51 = arith.mulf %43, %50 : vector<1x16xf32>
    %52 = arith.mulf %51, %50 : vector<1x16xf32>
    %53 = arith.mulf %32, %52 : vector<1x16xf32>
    %54 = arith.extui %11 : vector<1x16xi1> to vector<1x16xi32>
    %55 = arith.sitofp %54 : vector<1x16xi32> to vector<1x16xf32>
    %56 = tpu.concatenate %53, %55 in 0 : vector<1x16xf32>, vector<1x16xf32> -> vector<2x16xf32>
    %57 = vector.shape_cast %56 : vector<2x16xf32> to vector<1x2x16xf32>
    %c0_16 = arith.constant 0 : index
    %c0_17 = arith.constant 0 : index
    %c0_18 = arith.constant 0 : index
    %58 = vector.load %arg4[%c0_16, %c0_17, %c0_18] : memref<1x2x16xf32, #tpu.memory_space<vmem>>, vector<1x2x16xf32>
    tpu.vector_store %arg4[%c0_16, %c0_17, %c0_18], %57 {strides = array<i32>} : memref<1x2x16xf32, #tpu.memory_space<vmem>>, vector<1x2x16xf32>,
    return
  }
  func.func @transform_0(%arg0: i32) -> (i32, i32) {
    %c0_i32 = arith.constant 0 : i32
    %c0_i32_0 = arith.constant 0 : i32
    return %c0_i32, %arg0 : i32, i32
  }
  func.func @transform_1(%arg0: i32) -> (i32, i32) {
    %c0_i32 = arith.constant 0 : i32
    %c0_i32_0 = arith.constant 0 : i32
    return %c0_i32, %arg0 : i32, i32
  }
  func.func @transform_2(%arg0: i32) -> (i32, i32) {
    %c0_i32 = arith.constant 0 : i32
    %c0_i32_0 = arith.constant 0 : i32
    %c0_i32_1 = arith.constant 0 : i32
    return %c0_i32, %c0_i32_0 : i32, i32
  }
  func.func @transform_3(%arg0: i32) -> (i32, i32, i32) {
    %c0_i32 = arith.constant 0 : i32
    %c0_i32_0 = arith.constant 0 : i32
    %c0_i32_1 = arith.constant 0 : i32
    return %arg0, %c0_i32, %c0_i32_0 : i32, i32, i32
  }
}

</mosaic_0001>

<llo_original>
// kernel: tpu_custom_call.1
$region0: #{tpu_custom_call.1}
  #allocation0 [shape = 'u32[]', space=smem, size = 0x4, offset = 0x4, fixed_abs, tag = 'smem constant byte address 0x4 - core index']
  #allocation1 [shape = 'u32[144,128]{1,0:T(1,128)}', space=vmem, size = 0x12000, scoped, tag = 'internal scratch']
  %s0 = inlined_call_operand.vmem [shape: f32[9,16], index: 0, kind: input, shape index: {}]
  %s1 = inlined_call_operand.vmem [shape: s32[1,16], index: 1, kind: input, shape index: {}]
  %s2 = inlined_call_operand.vmem [shape: f32[9,1], index: 2, kind: input, shape index: {}]
  %s3 = inlined_call_operand.hbm [shape: f32[1,2,16], index: 3, kind: output, shape index: {}]
  %s4 = sld [smem:[#allocation0]]
  $region22: #{tpu_custom_call.1} parent=0
    _
  %s6 = ssub.s32 1, %s4
  %s7 = scalar_select 0, %s6, %s4
  $region1: #{tpu_custom_call.1} parent=0
    #allocation2 [shape = 'u8[1024]{0}', space=vmem, size = 0x400, scoped, tag = 'output window, operand 0, single buffered']
    #allocation3 [shape = 's32[1]{0}', space=sflag, size = 0x4, scoped, tag = 'scoped memory for tpu_custom_call.1']
    %8 = vsyncpa [#allocation3], 0
    // Predicated region
    $region2: #{tpu_custom_call.1} parent=1 // pred_check
      _
    $region3: #{tpu_custom_call.1} parent=1 // pred_check_branch
      %10 = sbr.rel (0) target = $region5
    $region4: #{tpu_custom_call.1} parent=1 // pred_region
      _
    $region5: #{tpu_custom_call.1} parent=1 // pred_fallthru
      _
    // Predicated region
    $region6: #{tpu_custom_call.1} parent=1 // pred_check
      _
    $region7: #{tpu_custom_call.1} parent=1 // pred_check_branch
      %12 = sbr.rel (0) target = $region9
    $region8: #{tpu_custom_call.1} parent=1 // pred_region
      _
    $region9: #{tpu_custom_call.1} parent=1 // pred_fallthru
      _
    // Predicated region
    $region10: #{tpu_custom_call.1} parent=1 // pred_check
      _
    $region11: #{tpu_custom_call.1} parent=1 // pred_check_branch
      %14 = sbr.rel (0) target = $region13
    $region12: #{tpu_custom_call.1} parent=1 // pred_region
      _
    $region13: #{tpu_custom_call.1} parent=1 // pred_fallthru
      _
    %v15 = vld [vmem:[%s0] sm:$0xff]
    %v16 = vld [vmem:[%s0 + $0x8] sm:$0x1]
    %v17 = vld [vmem:[%s1] sm:$0x1]
    %v18 = vld [vmem:[%s2] sm:$0xff]
    %v19 = vld [vmem:[%s2 + $0x8] sm:$0x1]
    %s20 = smul.u32 0, 16
    %v21 = vlaneseq
    %v22 = vand.u32 %v21, 127
    %v23 = vstv %s20
    %v24 = vadd.s32 %v23, %v22
    %vm25 = vcmp.ne.s32.totalorder %v17, 4294967196
    %vm26 = vcmp.lt.s32.totalorder %v24, 16
    %vm27 = vmand %vm25, %vm26
    %vm28 = vcmask 130048
    %v29 = vsel %vm28, %v15, -inf
    %vm30 = vcmask 122880
    %v31 = vsel %vm30, %v16, -inf
    %v32 = vmax.f32 %v29, %v31
    %v33 = vrot.slane %v32, 4
    %v34 = vmax.f32 %v32, %v33
    %v35 = vrot.slane %v34, 2
    %v36 = vmax.f32 %v34, %v35
    %v37 = vrot.slane %v36, 1
    %v38 = vmax.f32 %v36, %v37
    %v39 = vsub.f32 %v15, %v38
    %v40 = vsub.f32 %v16, %v38
    %v41 = vmul.f32 %v39, 1.442695
    %v42 = vpow.pop %v41
    %v43 = vmul.f32 %v40, 1.442695
    %v44 = vpow.pop %v43
    %v45 = vsel %vm28, %v42, 0.0
    %v46 = vsel %vm30, %v44, 0.0
    %v47 = vadd.f32 %v45, %v46
    %v48 = vrot.slane %v47, 4
    %v49 = vadd.f32 %v47, %v48
    %v50 = vrot.slane %v49, 2
    %v51 = vadd.f32 %v49, %v50
    %v52 = vrot.slane %v51, 1
    %v53 = vadd.f32 %v51, %v52
    %v54 = vlaneseq
    %v55 = vshrl.u32 %v54, 7
    %v56 = vadd.s32 %v55, 8
    %v57 = vlaneseq
    %v58 = vshrl.u32 %v57, 7
    %v59 = vsub.s32 0, %v58
    %v60 = vrot.slane %v17, %v59
    %vm61 = vcmp.eq.s32.totalorder %v55, %v60
    %vm62 = vcmp.eq.s32.totalorder %v56, %v60
    %v63 = vsel %vm27, 1, 0
    %v64 = vlaneseq
    %v65 = vshrl.u32 %v64, 7
    %v66 = vsub.s32 0, %v65
    %v67 = vrot.slane %v63, %v66
    %vm68 = vcmp.eq.s32.totalorder %v67, 1
    %vm69 = vmand %vm61, %vm68
    %vm70 = vmand %vm62, %vm68
    %v71 = vsel %vm69, 1, 0
    %v72 = vsel %vm70, 1, 0
    %v73 = vcvt.s32.f32 %v71
    %v74 = vcvt.s32.f32 %v72
    %v75 = vmul.f32 %v73, %v42
    %v76 = vmul.f32 %v74, %v44
    %v77 = vsel %vm28, %v75, 0.0
    %v78 = vsel %vm30, %v76, 0.0
    %v79 = vadd.f32 %v77, %v78
    %v80 = vrot.slane %v79, 4
    %v81 = vadd.f32 %v79, %v80
    %v82 = vrot.slane %v81, 2
    %v83 = vadd.f32 %v81, %v82
    %v84 = vrot.slane %v83, 1
    %v85 = vadd.f32 %v83, %v84
    %87 = vset.pattern.permute.xlu0 0
    %88 = vperm.xlu0 %87, %v18
    %v89 = vpop.permute.xlu0 %88
    %92 = vset.pattern.permute.xlu0 0
    %93 = vperm.xlu0 %92, %v19
    %v94 = vpop.permute.xlu0 %93
    %v96 = vmul.f32 %v73, %v89
    %v97 = vmul.f32 %v74, %v94
    %v98 = vsel %vm28, %v96, 0.0
    %v99 = vsel %vm30, %v97, 0.0
    %v100 = vadd.f32 %v98, %v99
    %v101 = vrot.slane %v100, 4
    %v102 = vadd.f32 %v100, %v101
    %v103 = vrot.slane %v102, 2
    %v104 = vadd.f32 %v102, %v103
    %v105 = vrot.slane %v104, 1
    %v106 = vadd.f32 %v104, %v105
    %v107 = vsel %vm27, %v53, 1.0
    %v108 = vmax.f32 %v85, 1e-37
    %v109 = vsel %vm27, %v108, 1.0
    %v110 = vlog2.pop %v107
    %v111 = vmul.f32 %v110, 0.6931472
    %v112 = vlog2.pop %v109
    %v113 = vmul.f32 %v112, 0.6931472
    %v114 = vsub.f32 %v111, %v113
    %v115 = vmax.f32 %v114, 0.0
    %v116 = vsub.f32 0.0, %v115
    %v117 = vmul.f32 %v116, 1.442695
    %v118 = vpow.pop %v117
    %v119 = vsub.f32 1.0, %v118
    %v120 = vmax.f32 %v119, 0.0
    %v121 = vmul.f32 %v115, %v120
    %v122 = vmul.f32 %v121, %v120
    %v123 = vmul.f32 %v106, %v122
    %v124 = vcvt.s32.f32 %v63
    %v126 = vlaneseq
    %v127 = vshrl.u32 %v126, 7
    %v128 = vsub.s32 0, %v127
    %v129 = vrot.slane %v124, %v128
    %vm131 = vcmask 1040384
    %v132 = vsel %vm131, %v123, %v129
    %vm133 = vcmask 123904
    %134 = vst.msk [vmem:[#allocation2] sm:$0x3] %vm133, %v132
    // Predicated region
    $region14: #{tpu_custom_call.1} parent=1 // pred_check
      _
    $region15: #{tpu_custom_call.1} parent=1 // pred_check_branch
      %136 = sbr.rel (0) target = $region17
    $region16: #{tpu_custom_call.1} parent=1 // pred_region
      %s138 = ssub.s32 32, 32
      %139 = vsyncadd [#allocation3], %s138
      %s141 = sshll.u32 [#allocation2], 4
      %s142 = int_to_ptr.vmem [resolvable:$true] %s141
      %144 = dma.vmem_to_hbm [thread:$0]  %s142, 32, %s3, [#allocation3]
    $region17: #{tpu_custom_call.1} parent=1 // pred_fallthru
      _
    // Predicated region
    $region18: #{tpu_custom_call.1} parent=1 // pred_check
      _
    $region19: #{tpu_custom_call.1} parent=1 // pred_check_branch
      %146 = sbr.rel (0) target = $region21
    $region20: #{tpu_custom_call.1} parent=1 // pred_region
      %147 = dma.done [#allocation3], 32
    $region21: #{tpu_custom_call.1} parent=1 // pred_fallthru
      _
    %148 = vsyncpa [#allocation3], 1

</llo_original>
